<compile_context>
chip_gen: v7x
topology: tpu7x:2x2x1
jax: 0.10.0
libtpu: 0.0.40
codegen_flags: <defaults>
</compile_context>

<pallas_src>
import functools

import jax
import jax.numpy as jnp
from jax.experimental import pallas as pl
from jax.experimental.pallas import tpu as pltpu

IN_FEATURES = 2048
HIDDEN = 100
OUT_FEATURES = 1
BN_EPS = 1e-5
TM_A_MAX = 1024                 # fc1 batch-tile cap (~18.5 MiB double-buffered)
TM_B_MAX = 4096                 # fc2 batch-tile cap (~3.2 MiB double-buffered)
VMEM_LIMIT = 32 * 1024 * 1024   # raise v5e's 16 MiB scoped-VMEM default


def _round_up(x, m):
    return ((x + m - 1) // m) * m


# ---------------- kernel A: fc1 + per-tile partial BN statistics ------------ #
def _fc1_stats_kernel(x_ref, w1_ref, b1_ref, fc1z_ref, sum_ref, sq_ref,
                      *, tm, batch, need_mask):
    # (TM, 2048) @ (2048, 100) + (1, 100); stored un-padded as (TM, 100).
    z = (jnp.dot(x_ref[...], w1_ref[...], preferred_element_type=jnp.float32)
         + b1_ref[...])
    fc1z_ref[...] = z

    # Partial BN statistics of relu(fc1_z) from data already in vregs.
    y = jnp.maximum(z, 0.0)
    if need_mask:
        # Last tile may cover rows >= B; keep those out of the statistics.
        row = (jax.lax.broadcasted_iota(jnp.int32, (tm, 1), 0)
               + pl.program_id(0) * tm)
        y = jnp.where(row < batch, y, 0.0)
    ssum = jnp.sum(y, axis=0, keepdims=True)           # (1, 100)
    ssq = jnp.sum(y * y, axis=0, keepdims=True)        # (1, 100)
    sum_ref[...] = jnp.broadcast_to(ssum, (8, HIDDEN))
    sq_ref[...] = jnp.broadcast_to(ssq, (8, HIDDEN))


# ---------------- kernel B: folded BN affine + fc2 -------------------------- #
def _bn_fc2_kernel(fc1z_ref, weff_ref, ceff_ref, out_ref):
    # ReLU recomputed (VPU, ~free); BN affine + fc2 folded into w_eff / c_eff.
    # (1,100) x (TM,100)^T puts the per-row result on the LANE axis ->
    # lane-dense (1, TM) store; the wrapper reshapes the (1, B) row to (B, 1).
    y = jnp.maximum(fc1z_ref[...], 0.0)
    acc = jax.lax.dot_general(
        weff_ref[...], y,
        dimension_numbers=(((1,), (1,)), ((), ())),
        preferred_element_type=jnp.float32)             # (1, TM)
    out_ref[...] = acc + ceff_ref[0, 0]


# --------------------------------- wrapper ---------------------------------- #
def model_linear_forward(x, w1_t, b1, gamma, beta, w2_t, b2):
    """Forward pass.

    Args:
      x:      (B, 2048) f32
      w1_t:   (2048, 100) f32   (fc1.weight transposed)
      b1:     (1, 100)    f32
      gamma:  (1, 100)    f32   (BN weight)
      beta:   (1, 100)    f32   (BN bias)
      w2_t:   (100, 1)    f32   (fc2.weight transposed)
      b2:     (1, 1)      f32
    Returns:
      (fc2_z, fc1_z) with shapes ((B, 1), (B, 100)).
    """
    B = x.shape[0]

    # Kernel-A tile: at least 2 tiles when B > 8 (spans both v7x TCs), capped.
    if B <= 8:
        tm_a = B
    else:
        tm_a = min(_round_up((B + 1) // 2, 8), TM_A_MAX)
    tiles_a = (B + tm_a - 1) // tm_a
    need_mask = (B % tm_a) != 0

    fc1_cost = pl.CostEstimate(
        flops=2 * B * IN_FEATURES * HIDDEN,
        transcendentals=0,
        bytes_accessed=4 * (B * IN_FEATURES + IN_FEATURES * HIDDEN
                            + B * HIDDEN + 2 * tiles_a * 8 * HIDDEN))

    kern_a = functools.partial(_fc1_stats_kernel, tm=tm_a, batch=B,
                               need_mask=need_mask)
    fc1_z, psum, psq = pl.pallas_call(
        kern_a,
        out_shape=(
            jax.ShapeDtypeStruct((B, HIDDEN), jnp.float32),
            jax.ShapeDtypeStruct((tiles_a * 8, HIDDEN), jnp.float32),
            jax.ShapeDtypeStruct((tiles_a * 8, HIDDEN), jnp.float32),
        ),
        grid=(tiles_a,),
        in_specs=[
            pl.BlockSpec((tm_a, IN_FEATURES), lambda i: (i, 0)),
            pl.BlockSpec((IN_FEATURES, HIDDEN), lambda i: (0, 0)),
            pl.BlockSpec((1, HIDDEN), lambda i: (0, 0)),
        ],
        out_specs=(
            pl.BlockSpec((tm_a, HIDDEN), lambda i: (i, 0)),
            pl.BlockSpec((8, HIDDEN), lambda i: (i, 0)),
            pl.BlockSpec((8, HIDDEN), lambda i: (i, 0)),
        ),
        compiler_params=pltpu.CompilerParams(
            dimension_semantics=("parallel",),
            vmem_limit_bytes=VMEM_LIMIT),
        cost_estimate=fc1_cost,
    )(x, w1_t, b1)

    # ---- BN statistics finalization: tiny (tiles_a, 100) reduction in JAX ----
    w2_row = w2_t.reshape(1, HIDDEN)                                   # (1,100)
    if B > 1:
        s = jnp.sum(psum.reshape(tiles_a, 8, HIDDEN)[:, 0, :], axis=0)  # (100,)
        sq = jnp.sum(psq.reshape(tiles_a, 8, HIDDEN)[:, 0, :], axis=0)  # (100,)
        mean = s / B
        var = jnp.maximum(sq / B - mean * mean, 0.0)
        inv_std = jax.lax.rsqrt(var + BN_EPS)
        scale = (gamma.reshape(HIDDEN) * inv_std).reshape(1, HIDDEN)
        shift = beta.reshape(1, HIDDEN) - mean.reshape(1, HIDDEN) * scale
    else:
        # Matches `if fc1_d.shape[0] > 1` in PyTorch: B == 1 skips BN.
        scale = jnp.ones((1, HIDDEN), jnp.float32)
        shift = jnp.zeros((1, HIDDEN), jnp.float32)
    # TODO(synk): BatchNorm1d running_mean/running_var updates (momentum=0.3,
    # training-mode side effect) are not emitted; the returned tensors don't use them.

    # Fold BN affine + fc2:  fc2 = relu(fc1_z) . (scale*w2) + (b2 + shift.w2)
    w_eff = scale * w2_row                                             # (1,100)
    c_eff = (b2 + jnp.sum(shift * w2_row)).reshape(1, 1)               # (1,1)

    # ---- kernel B: fold + fc2, batch on the lane axis, large independent tile
    if B <= 256:
        tm_b = B
    else:
        tm_b = min(_round_up((B + 1) // 2, 128), TM_B_MAX)
    tiles_b = (B + tm_b - 1) // tm_b

    fc2_cost = pl.CostEstimate(
        flops=2 * B * HIDDEN,
        transcendentals=0,
        bytes_accessed=4 * (B * HIDDEN + HIDDEN + B))
    fc2_row = pl.pallas_call(
        _bn_fc2_kernel,
        out_shape=jax.ShapeDtypeStruct((1, B), jnp.float32),
        grid=(tiles_b,),
        in_specs=[
            pl.BlockSpec((tm_b, HIDDEN), lambda i: (i, 0)),
            pl.BlockSpec((1, HIDDEN), lambda i: (0, 0)),
            pl.BlockSpec(memory_space=pltpu.MemorySpace.SMEM),   # c_eff scalar
        ],
        out_specs=pl.BlockSpec((1, tm_b), lambda i: (0, i)),
        compiler_params=pltpu.CompilerParams(
            dimension_semantics=("parallel",)),
        cost_estimate=fc2_cost,
    )(fc1_z, w_eff, c_eff)

    fc2_z = fc2_row.reshape(B, OUT_FEATURES)    # (1,B) row -> (B,1); no transpose
    return fc2_z, fc1_z


# --------------------------- pure-JAX reference ----------------------------- #
def reference_forward(x, w1_t, b1, gamma, beta, w2_t, b2):
    fc1_z = x @ w1_t + b1
    y = jnp.maximum(fc1_z, 0.0)
    if x.shape[0] > 1:
        mean = jnp.mean(y, axis=0, keepdims=True)
        var = jnp.mean((y - mean) ** 2, axis=0, keepdims=True)
        y = (y - mean) * jax.lax.rsqrt(var + BN_EPS) * gamma + beta
    fc2_z = y @ w2_t + b2
    return fc2_z, fc1_z


if __name__ == "__main__":
    key = jax.random.PRNGKey(0)
    kx, kw1, kb1, kw2, kb2 = jax.random.split(key, 5)

    B = 8
    x = jax.random.normal(kx, (B, IN_FEATURES), dtype=jnp.float32)

    # fc1.weight ~ N(0, 1), bias ~ U(-1/sqrt(fan_in), +)
    w1_t = jax.random.normal(kw1, (IN_FEATURES, HIDDEN), dtype=jnp.float32)
    bound1 = 1.0 / (IN_FEATURES ** 0.5)
    b1 = jax.random.uniform(kb1, (1, HIDDEN), minval=-bound1, maxval=bound1,
                            dtype=jnp.float32)

    # BatchNorm1d affine params at init: gamma = 1, beta = 0.
    gamma = jnp.ones((1, HIDDEN), dtype=jnp.float32)
    beta = jnp.zeros((1, HIDDEN), dtype=jnp.float32)

    # fc2.weight ~ N(0, 1), bias ~ U(-1/sqrt(100), +1/sqrt(100))
    w2_t = jax.random.normal(kw2, (HIDDEN, OUT_FEATURES), dtype=jnp.float32)
    bound2 = 1.0 / (HIDDEN ** 0.5)
    b2 = jax.random.uniform(kb2, (1, OUT_FEATURES), minval=-bound2, maxval=bound2,
                            dtype=jnp.float32)

    forward = jax.jit(model_linear_forward)

    # Batched path (BN active), single tile.
    fc2_z, fc1_z = forward(x, w1_t, b1, gamma, beta, w2_t, b2)
    jax.block_until_ready((fc2_z, fc1_z))
    ref2, ref1 = reference_forward(x, w1_t, b1, gamma, beta, w2_t, b2)
    assert fc2_z.shape == (B, OUT_FEATURES) and fc1_z.shape == (B, HIDDEN)
    assert jnp.allclose(fc1_z, ref1, atol=1e-3, rtol=1e-3)
    assert jnp.allclose(fc2_z, ref2, atol=1e-3, rtol=1e-3)

    # Multi-tile path with a partial boundary tile (B=24 -> TM=16, 2 tiles):
    # exercises the in-kernel row mask that keeps garbage rows out of BN stats.
    B2 = 24
    x24 = jax.random.normal(jax.random.PRNGKey(1), (B2, IN_FEATURES),
                            dtype=jnp.float32)
    fc2_24, fc1_24 = forward(x24, w1_t, b1, gamma, beta, w2_t, b2)
    jax.block_until_ready((fc2_24, fc1_24))
    r2_24, r1_24 = reference_forward(x24, w1_t, b1, gamma, beta, w2_t, b2)
    assert jnp.allclose(fc1_24, r1_24, atol=1e-3, rtol=1e-3)
    assert jnp.allclose(fc2_24, r2_24, atol=1e-3, rtol=1e-3)

    # Single-row path (BN skipped, matches the PyTorch shape[0] > 1 branch).
    x1 = x[:1]
    fc2_1, fc1_1 = forward(x1, w1_t, b1, gamma, beta, w2_t, b2)
    jax.block_until_ready((fc2_1, fc1_1))
    r2, r1 = reference_forward(x1, w1_t, b1, gamma, beta, w2_t, b2)
    assert jnp.allclose(fc1_1, r1, atol=1e-3, rtol=1e-3)
    assert jnp.allclose(fc2_1, r2, atol=1e-3, rtol=1e-3)

    print("KERNEL_OK")
</pallas_src>

<mosaic_0001>
module attributes {stable_mosaic.version = 11 : i64} {
  func.func @_fc1_stats_kernel(%arg0: i32, %arg1: memref<8x2048xf32, #tpu.memory_space<vmem>>, %arg2: memref<2048x100xf32, #tpu.memory_space<vmem>>, %arg3: memref<1x100xf32, #tpu.memory_space<vmem>>, %arg4: memref<8x100xf32, #tpu.memory_space<vmem>>, %arg5: memref<8x100xf32, #tpu.memory_space<vmem>>, %arg6: memref<8x100xf32, #tpu.memory_space<vmem>>) attributes {dimension_semantics = [#tpu.dimension_semantics<parallel>], iteration_bounds = array<i64: 1>, scalar_prefetch = 0 : i64, scratch_operands = 0 : i64, tpu.core_type = #tpu.core_type<tc>, window_params = [{transform_indices = @transform_0, window_bounds = array<i64: 8, 2048>}, {pipeline_mode = #tpu.pipeline_mode<synchronous>, transform_indices = @transform_1, window_bounds = array<i64: 2048, 100>}, {pipeline_mode = #tpu.pipeline_mode<synchronous>, transform_indices = @transform_2, window_bounds = array<i64: 1, 100>}, {transform_indices = @transform_3, window_bounds = array<i64: 8, 100>}, {transform_indices = @transform_4, window_bounds = array<i64: 8, 100>}, {transform_indices = @transform_5, window_bounds = array<i64: 8, 100>}]} {
    %c0 = arith.constant 0 : index
    %c0_0 = arith.constant 0 : index
    %0 = vector.load %arg1[%c0, %c0_0] : memref<8x2048xf32, #tpu.memory_space<vmem>>, vector<8x2048xf32>
    %c0_1 = arith.constant 0 : index
    %c0_2 = arith.constant 0 : index
    %1 = vector.load %arg2[%c0_1, %c0_2] : memref<2048x100xf32, #tpu.memory_space<vmem>>, vector<2048x100xf32>
    %cst = arith.constant dense<0.000000e+00> : vector<8x100xf32>
    %2 = tpu.matmul %0, %1, %cst {dimension_numbers = #tpu.dot_dimension_numbers<[1], [0], [0], [1], [0, 0, 1, 1], [], []>} : vector<8x2048xf32>, vector<2048x100xf32>, vector<8x100xf32> -> vector<8x100xf32>
    %c0_3 = arith.constant 0 : index
    %c0_4 = arith.constant 0 : index
    %3 = vector.load %arg3[%c0_3, %c0_4] : memref<1x100xf32, #tpu.memory_space<vmem>>, vector<1x100xf32>
    %4 = vector.broadcast %3 : vector<1x100xf32> to vector<8x100xf32>
    %5 = arith.addf %2, %4 : vector<8x100xf32>
    %c0_5 = arith.constant 0 : index
    %c0_6 = arith.constant 0 : index
    %6 = vector.load %arg4[%c0_5, %c0_6] : memref<8x100xf32, #tpu.memory_space<vmem>>, vector<8x100xf32>
    tpu.vector_store %arg4[%c0_5, %c0_6], %5 {strides = array<i32>} : memref<8x100xf32, #tpu.memory_space<vmem>>, vector<8x100xf32>,
    %cst_7 = arith.constant 0.000000e+00 : f32
    %7 = vector.broadcast %cst_7 : f32 to vector<8x100xf32>
    %8 = arith.maximumf %5, %7 : vector<8x100xf32>
    %cst_8 = arith.constant dense<0.000000e+00> : vector<100xf32>
    %9 = vector.multi_reduction <add>, %8, %cst_8 [0] : vector<8x100xf32> to vector<100xf32>
    %10 = vector.shape_cast %9 : vector<100xf32> to vector<1x100xf32>
    %11 = arith.mulf %8, %8 : vector<8x100xf32>
    %cst_9 = arith.constant dense<0.000000e+00> : vector<100xf32>
    %12 = vector.multi_reduction <add>, %11, %cst_9 [0] : vector<8x100xf32> to vector<100xf32>
    %13 = vector.shape_cast %12 : vector<100xf32> to vector<1x100xf32>
    %14 = vector.shape_cast %10 : vector<1x100xf32> to vector<1x100xf32>
    %15 = vector.broadcast %14 : vector<1x100xf32> to vector<8x100xf32>
    %c0_10 = arith.constant 0 : index
    %c0_11 = arith.constant 0 : index
    %16 = vector.load %arg5[%c0_10, %c0_11] : memref<8x100xf32, #tpu.memory_space<vmem>>, vector<8x100xf32>
    tpu.vector_store %arg5[%c0_10, %c0_11], %15 {strides = array<i32>} : memref<8x100xf32, #tpu.memory_space<vmem>>, vector<8x100xf32>,
    %17 = vector.shape_cast %13 : vector<1x100xf32> to vector<1x100xf32>
    %18 = vector.broadcast %17 : vector<1x100xf32> to vector<8x100xf32>
    %c0_12 = arith.constant 0 : index
    %c0_13 = arith.constant 0 : index
    %19 = vector.load %arg6[%c0_12, %c0_13] : memref<8x100xf32, #tpu.memory_space<vmem>>, vector<8x100xf32>
    tpu.vector_store %arg6[%c0_12, %c0_13], %18 {strides = array<i32>} : memref<8x100xf32, #tpu.memory_space<vmem>>, vector<8x100xf32>,
    return
  }
  func.func @transform_0(%arg0: i32) -> (i32, i32) {
    %c0_i32 = arith.constant 0 : i32
    %c0_i32_0 = arith.constant 0 : i32
    return %arg0, %c0_i32 : i32, i32
  }
  func.func @transform_1(%arg0: i32) -> (i32, i32) {
    %c0_i32 = arith.constant 0 : i32
    %c0_i32_0 = arith.constant 0 : i32
    %c0_i32_1 = arith.constant 0 : i32
    return %c0_i32, %c0_i32_0 : i32, i32
  }
  func.func @transform_2(%arg0: i32) -> (i32, i32) {
    %c0_i32 = arith.constant 0 : i32
    %c0_i32_0 = arith.constant 0 : i32
    %c0_i32_1 = arith.constant 0 : i32
    return %c0_i32, %c0_i32_0 : i32, i32
  }
  func.func @transform_3(%arg0: i32) -> (i32, i32) {
    %c0_i32 = arith.constant 0 : i32
    %c0_i32_0 = arith.constant 0 : i32
    return %arg0, %c0_i32 : i32, i32
  }
  func.func @transform_4(%arg0: i32) -> (i32, i32) {
    %c0_i32 = arith.constant 0 : i32
    %c0_i32_0 = arith.constant 0 : i32
    return %arg0, %c0_i32 : i32, i32
  }
  func.func @transform_5(%arg0: i32) -> (i32, i32) {
    %c0_i32 = arith.constant 0 : i32
    %c0_i32_0 = arith.constant 0 : i32
    return %arg0, %c0_i32 : i32, i32
  }
}

module attributes {stable_mosaic.version = 11 : i64} {
  func.func @_bn_fc2_kernel(%arg0: i32, %arg1: memref<8x100xf32, #tpu.memory_space<vmem>>, %arg2: memref<1x100xf32, #tpu.memory_space<vmem>>, %arg3: memref<1x1xf32, #tpu.memory_space<smem>>, %arg4: memref<1x8xf32, #tpu.memory_space<vmem>>) attributes {dimension_semantics = [#tpu.dimension_semantics<parallel>], iteration_bounds = array<i64: 1>, scalar_prefetch = 0 : i64, scratch_operands = 0 : i64, tpu.core_type = #tpu.core_type<tc>, window_params = [{transform_indices = @transform_0, window_bounds = array<i64: 8, 100>}, {pipeline_mode = #tpu.pipeline_mode<synchronous>, transform_indices = @transform_1, window_bounds = array<i64: 1, 100>}, {transform_indices = @transform_2, window_bounds = array<i64: 1, 1>}, {transform_indices = @transform_3, window_bounds = array<i64: 1, 8>}]} {
    %c0 = arith.constant 0 : index
    %c0_0 = arith.constant 0 : index
    %0 = vector.load %arg1[%c0, %c0_0] : memref<8x100xf32, #tpu.memory_space<vmem>>, vector<8x100xf32>
    %cst = arith.constant 0.000000e+00 : f32
    %1 = vector.broadcast %cst : f32 to vector<8x100xf32>
    %2 = arith.maximumf %0, %1 : vector<8x100xf32>
    %c0_1 = arith.constant 0 : index
    %c0_2 = arith.constant 0 : index
    %3 = vector.load %arg2[%c0_1, %c0_2] : memref<1x100xf32, #tpu.memory_space<vmem>>, vector<1x100xf32>
    %cst_3 = arith.constant dense<0.000000e+00> : vector<1x8xf32>
    %4 = tpu.matmul %3, %2, %cst_3 {dimension_numbers = #tpu.dot_dimension_numbers<[1], [1], [0], [0], [0, 0, 1, 0], [], []>} : vector<1x100xf32>, vector<8x100xf32>, vector<1x8xf32> -> vector<1x8xf32>
    %c0_4 = arith.constant 0 : index
    %c0_5 = arith.constant 0 : index
    %5 = memref.load %arg3[%c0_4, %c0_5] : memref<1x1xf32, #tpu.memory_space<smem>>
    %6 = vector.broadcast %5 : f32 to vector<1x8xf32>
    %7 = arith.addf %4, %6 : vector<1x8xf32>
    %c0_6 = arith.constant 0 : index
    %c0_7 = arith.constant 0 : index
    %8 = vector.load %arg4[%c0_6, %c0_7] : memref<1x8xf32, #tpu.memory_space<vmem>>, vector<1x8xf32>
    tpu.vector_store %arg4[%c0_6, %c0_7], %7 {strides = array<i32>} : memref<1x8xf32, #tpu.memory_space<vmem>>, vector<1x8xf32>,
    return
  }
  func.func @transform_0(%arg0: i32) -> (i32, i32) {
    %c0_i32 = arith.constant 0 : i32
    %c0_i32_0 = arith.constant 0 : i32
    return %arg0, %c0_i32 : i32, i32
  }
  func.func @transform_1(%arg0: i32) -> (i32, i32) {
    %c0_i32 = arith.constant 0 : i32
    %c0_i32_0 = arith.constant 0 : i32
    %c0_i32_1 = arith.constant 0 : i32
    return %c0_i32, %c0_i32_0 : i32, i32
  }
  func.func @transform_2(%arg0: i32) -> (i32, i32) {
    %c0_i32 = arith.constant 0 : i32
    %c0_i32_0 = arith.constant 0 : i32
    %c0_i32_1 = arith.constant 0 : i32
    return %c0_i32, %c0_i32_0 : i32, i32
  }
  func.func @transform_3(%arg0: i32) -> (i32, i32) {
    %c0_i32 = arith.constant 0 : i32
    %c0_i32_0 = arith.constant 0 : i32
    return %c0_i32, %arg0 : i32, i32
  }
}

</mosaic_0001>

<llo_original>
// kernel: model_linear_forward.3
$region0: #{model_linear_forward.3}
  #allocation0 [shape = 'u32[]', space=smem, size = 0x4, offset = 0x4, fixed_abs, tag = 'smem constant byte address 0x4 - core index']
  #allocation1 [shape = 'u32[144,128]{1,0:T(1,128)}', space=vmem, size = 0x12000, scoped, tag = 'internal scratch']
  #allocation2 [shape = 'f32[1,1]{1,0:T(1,128)S(6)}', space=smem, size = 0x200, scoped, tag = 'scoped memory for model_linear_forward.3']
  %s0 = inlined_call_operand.vmem [shape: f32[8,100], index: 0, kind: input, shape index: {}]
  %s1 = inlined_call_operand.vmem [shape: f32[1,100], index: 1, kind: input, shape index: {}]
  %s2 = inlined_call_operand.<no memory space> [shape: f32[1,1], index: 2, kind: input, shape index: {}]
  %s3 = inlined_call_operand.hbm [shape: f32[1,8], index: 3, kind: output, shape index: {}]
  %s4 = sld [smem:[#allocation0]]
  $region22: #{model_linear_forward.3} parent=0
    _
  %s6 = ssub.s32 1, %s4
  %s7 = scalar_select 0, %s6, %s4
  %8 = sst [smem:[#allocation2]] %s2
  $region1: #{model_linear_forward.3} parent=0
    #allocation3 [shape = 'u8[512]{0}', space=vmem, size = 0x400, scoped, tag = 'output window, operand 0, single buffered']
    #allocation4 [shape = 's32[1]{0}', space=sflag, size = 0x4, scoped, tag = 'scoped memory for model_linear_forward.3']
    %9 = vsyncpa [#allocation4], 0
    // Predicated region
    $region2: #{model_linear_forward.3} parent=1 // pred_check
      _
    $region3: #{model_linear_forward.3} parent=1 // pred_check_branch
      %11 = sbr.rel (0) target = $region5
    $region4: #{model_linear_forward.3} parent=1 // pred_region
      _
    $region5: #{model_linear_forward.3} parent=1 // pred_fallthru
      _
    // Predicated region
    $region6: #{model_linear_forward.3} parent=1 // pred_check
      _
    $region7: #{model_linear_forward.3} parent=1 // pred_check_branch
      %13 = sbr.rel (0) target = $region9
    $region8: #{model_linear_forward.3} parent=1 // pred_region
      _
    $region9: #{model_linear_forward.3} parent=1 // pred_fallthru
      _
    // Predicated region
    $region10: #{model_linear_forward.3} parent=1 // pred_check
      _
    $region11: #{model_linear_forward.3} parent=1 // pred_check_branch
      %15 = sbr.rel (0) target = $region13
    $region12: #{model_linear_forward.3} parent=1 // pred_region
      _
    $region13: #{model_linear_forward.3} parent=1 // pred_fallthru
      _
    %v16 = vld [vmem:[%s0] sm:$0xff]
    %v17 = vmax.f32 %v16, 0.0
    %v18 = vld [vmem:[%s1] sm:$0x1]
    %s19 = sld [smem:[#allocation2]]
    %v20 = vstv %s19
    %vm21 = vcmask 818176
    %v23 = vsel %vm21, %v18, 0
    %v26 = vsel %vm21, %v17, 0
    %28 = vmatprep.subr.mxu0 0.0
    %29 = vmatpush1.xpose.msra.mxu0 %v26
    %30 = vmatprep.subr.mxu0 0.0
    %31 = vmatpush1.xpose.msra.mxu0 0.0
    %32 = vmatprep.subr.mxu0 0.0
    %33 = vmatpush1.xpose.msra.mxu0 0.0
    %34 = vmatprep.subr.mxu0 0.0
    %35 = vmatpush1.xpose.msra.mxu0 0.0
    %36 = vmatprep.subr.mxu0 0.0
    %37 = vmatpush1.xpose.msra.mxu0 0.0
    %38 = vmatprep.subr.mxu0 0.0
    %39 = vmatpush1.xpose.msra.mxu0 0.0
    %40 = vmatprep.subr.mxu0 0.0
    %41 = vmatpush1.xpose.msra.mxu0 0.0
    %42 = vmatprep.subr.mxu0 0.0
    %43 = vmatpush1.xpose.msra.mxu0 0.0
    %44 = vmatprep.subr.mxu0 0.0
    %45 = vmatpush1.xpose.msra.mxu0 0.0
    %46 = vmatprep.subr.mxu0 0.0
    %47 = vmatpush1.xpose.msra.mxu0 0.0
    %48 = vmatprep.subr.mxu0 0.0
    %49 = vmatpush1.xpose.msra.mxu0 0.0
    %50 = vmatprep.subr.mxu0 0.0
    %51 = vmatpush1.xpose.msra.mxu0 0.0
    %52 = vmatprep.subr.mxu0 0.0
    %53 = vmatpush1.xpose.msra.mxu0 0.0
    %54 = vmatprep.subr.mxu0 0.0
    %55 = vmatpush1.xpose.msra.mxu0 0.0
    %56 = vmatprep.subr.mxu0 0.0
    %57 = vmatpush1.xpose.msra.mxu0 0.0
    %58 = vmatprep.subr.mxu0 0.0
    %59 = vmatpush1.xpose.msra.mxu0 0.0
    %60 = vmatprep.subr.mxu0 0.0
    %61 = vmatpush1.xpose.msra.mxu0 0.0
    %62 = vmatprep.subr.mxu0 0.0
    %63 = vmatpush1.xpose.msra.mxu0 0.0
    %64 = vmatprep.subr.mxu0 0.0
    %65 = vmatpush1.xpose.msra.mxu0 0.0
    %66 = vmatprep.subr.mxu0 0.0
    %67 = vmatpush1.xpose.msra.mxu0 0.0
    %68 = vmatprep.subr.mxu0 0.0
    %69 = vmatpush1.xpose.msra.mxu0 0.0
    %70 = vmatprep.subr.mxu0 0.0
    %71 = vmatpush1.xpose.msra.mxu0 0.0
    %72 = vmatprep.subr.mxu0 0.0
    %73 = vmatpush1.xpose.msra.mxu0 0.0
    %74 = vmatprep.subr.mxu0 0.0
    %75 = vmatpush1.xpose.msra.mxu0 0.0
    %76 = vmatprep.subr.mxu0 0.0
    %77 = vmatpush1.xpose.msra.mxu0 0.0
    %78 = vmatprep.subr.mxu0 0.0
    %79 = vmatpush1.xpose.msra.mxu0 0.0
    %80 = vmatprep.subr.mxu0 0.0
    %81 = vmatpush1.xpose.msra.mxu0 0.0
    %82 = vmatprep.subr.mxu0 0.0
    %83 = vmatpush1.xpose.msra.mxu0 0.0
    %84 = vmatprep.subr.mxu0 0.0
    %85 = vmatpush1.xpose.msra.mxu0 0.0
    %86 = vmatprep.subr.mxu0 0.0
    %87 = vmatpush1.xpose.msra.mxu0 0.0
    %88 = vmatprep.subr.mxu0 0.0
    %89 = vmatpush1.xpose.msra.mxu0 0.0
    %90 = vmatprep.subr.mxu0 0.0
    %91 = vmatpush1.xpose.msra.mxu0 0.0
    %92 = vmatprep.mubr.f32.mxu0 0.0
    %93 = vmatmul.mubr.f32.gmra.mrb[0].mxu0 %v23
    %v94 = vpop.f32.mrb[0].mxu0
    %v95 = vadd.f32 %v20, %v94
    %v96 = vpop.f32.mrb[0].mxu0
    %97 = vdwg.mxu0
    %vm98 = vcmask 57344
    %99 = vst.msk [vmem:[#allocation3] sm:$0x1] %vm98, %v95
    // Predicated region
    $region14: #{model_linear_forward.3} parent=1 // pred_check
      _
    $region15: #{model_linear_forward.3} parent=1 // pred_check_branch
      %101 = sbr.rel (0) target = $region17
    $region16: #{model_linear_forward.3} parent=1 // pred_region
      %s103 = ssub.s32 16, 16
      %104 = vsyncadd [#allocation4], %s103
      %s106 = sshll.u32 [#allocation3], 4
      %s107 = int_to_ptr.vmem [resolvable:$true] %s106
      %109 = dma.vmem_to_hbm [thread:$0]  %s107, 16, %s3, [#allocation4]
    $region17: #{model_linear_forward.3} parent=1 // pred_fallthru
      _
    // Predicated region
    $region18: #{model_linear_forward.3} parent=1 // pred_check
      _
    $region19: #{model_linear_forward.3} parent=1 // pred_check_branch
      %111 = sbr.rel (0) target = $region21
    $region20: #{model_linear_forward.3} parent=1 // pred_region
      %112 = dma.done [#allocation4], 16
    $region21: #{model_linear_forward.3} parent=1 // pred_fallthru
      _
    %113 = vsyncpa [#allocation4], 1

// kernel: model_linear_forward.2
$region0: #{model_linear_forward.2}
  #allocation0 [shape = 'u32[]', space=smem, size = 0x4, offset = 0x4, fixed_abs, tag = 'smem constant byte address 0x4 - core index']
  #allocation1 [shape = 'u32[144,128]{1,0:T(1,128)}', space=vmem, size = 0x12000, scoped, tag = 'internal scratch']
  %s0 = inlined_call_operand.vmem [shape: f32[8,2048], index: 0, kind: input, shape index: {}]
  %s1 = inlined_call_operand.vmem [shape: f32[2048,100], index: 1, kind: input, shape index: {}]
  %s2 = inlined_call_operand.vmem [shape: f32[1,100], index: 2, kind: input, shape index: {}]
  %s3 = inlined_call_operand.vmem [shape: f32[8,100], index: 3, kind: output, shape index: {0}]
  %s4 = inlined_call_operand.vmem [shape: f32[8,100], index: 4, kind: output, shape index: {1}]
  %s5 = inlined_call_operand.vmem [shape: f32[8,100], index: 5, kind: output, shape index: {2}]
  %6 = xla_tuple %s3, %s4, %s5
  %s7 = sld [smem:[#allocation0]]
  $region38: #{model_linear_forward.2} parent=0
    _
  %s9 = ssub.s32 1, %s7
  %s10 = scalar_select 0, %s9, %s7
  // Predicated region
  $region2: #{model_linear_forward.2} parent=0 // pred_check
    _
  $region3: #{model_linear_forward.2} parent=0 // pred_check_branch
    %12 = sbr.rel (0) target = $region5
  $region4: #{model_linear_forward.2} parent=0 // pred_region
    _
  $region5: #{model_linear_forward.2} parent=0 // pred_fallthru
    _
  // Predicated region
  $region6: #{model_linear_forward.2} parent=0 // pred_check
    _
  $region7: #{model_linear_forward.2} parent=0 // pred_check_branch
    %14 = sbr.rel (0) target = $region9
  $region8: #{model_linear_forward.2} parent=0 // pred_region
    _
  $region9: #{model_linear_forward.2} parent=0 // pred_fallthru
    _
  // Predicated region
  $region10: #{model_linear_forward.2} parent=0 // pred_check
    _
  $region11: #{model_linear_forward.2} parent=0 // pred_check_branch
    %16 = sbr.rel (0) target = $region13
  $region12: #{model_linear_forward.2} parent=0 // pred_region
    _
  $region13: #{model_linear_forward.2} parent=0 // pred_fallthru
    _
  %v17 = vld [vmem:[%s0] sm:$0xff]
  %v18 = vld [vmem:[%s0 + $0x8] sm:$0xff]
  %v19 = vld [vmem:[%s0 + $0x10] sm:$0xff]
  %v20 = vld [vmem:[%s0 + $0x18] sm:$0xff]
  %v21 = vld [vmem:[%s0 + $0x20] sm:$0xff]
  %v22 = vld [vmem:[%s0 + $0x28] sm:$0xff]
  %v23 = vld [vmem:[%s0 + $0x30] sm:$0xff]
  %v24 = vld [vmem:[%s0 + $0x38] sm:$0xff]
  %v25 = vld [vmem:[%s0 + $0x40] sm:$0xff]
  %v26 = vld [vmem:[%s0 + $0x48] sm:$0xff]
  %v27 = vld [vmem:[%s0 + $0x50] sm:$0xff]
  %v28 = vld [vmem:[%s0 + $0x58] sm:$0xff]
  %v29 = vld [vmem:[%s0 + $0x60] sm:$0xff]
  %v30 = vld [vmem:[%s0 + $0x68] sm:$0xff]
  %v31 = vld [vmem:[%s0 + $0x70] sm:$0xff]
  %v32 = vld [vmem:[%s0 + $0x78] sm:$0xff]
  %v33 = vld [vmem:[%s1] sm:$0xff]
  %v34 = vld [vmem:[%s1 + $0x8] sm:$0xff]
  %v35 = vld [vmem:[%s1 + $0x10] sm:$0xff]
  %v36 = vld [vmem:[%s1 + $0x18] sm:$0xff]
  %v37 = vld [vmem:[%s1 + $0x20] sm:$0xff]
  %v38 = vld [vmem:[%s1 + $0x28] sm:$0xff]
  %v39 = vld [vmem:[%s1 + $0x30] sm:$0xff]
  %v40 = vld [vmem:[%s1 + $0x38] sm:$0xff]
  %v41 = vld [vmem:[%s1 + $0x40] sm:$0xff]
  %v42 = vld [vmem:[%s1 + $0x48] sm:$0xff]
  %v43 = vld [vmem:[%s1 + $0x50] sm:$0xff]
  %v44 = vld [vmem:[%s1 + $0x58] sm:$0xff]
  %v45 = vld [vmem:[%s1 + $0x60] sm:$0xff]
  %v46 = vld [vmem:[%s1 + $0x68] sm:$0xff]
  %v47 = vld [vmem:[%s1 + $0x70] sm:$0xff]
  %v48 = vld [vmem:[%s1 + $0x78] sm:$0xff]
  %v49 = vld [vmem:[%s1 + $0x80] sm:$0xff]
  %v50 = vld [vmem:[%s1 + $0x88] sm:$0xff]
  %v51 = vld [vmem:[%s1 + $0x90] sm:$0xff]
  %v52 = vld [vmem:[%s1 + $0x98] sm:$0xff]
  %v53 = vld [vmem:[%s1 + $0xa0] sm:$0xff]
  %v54 = vld [vmem:[%s1 + $0xa8] sm:$0xff]
  %v55 = vld [vmem:[%s1 + $0xb0] sm:$0xff]
  %v56 = vld [vmem:[%s1 + $0xb8] sm:$0xff]
  %v57 = vld [vmem:[%s1 + $0xc0] sm:$0xff]
  %v58 = vld [vmem:[%s1 + $0xc8] sm:$0xff]
  %v59 = vld [vmem:[%s1 + $0xd0] sm:$0xff]
  %v60 = vld [vmem:[%s1 + $0xd8] sm:$0xff]
  %v61 = vld [vmem:[%s1 + $0xe0] sm:$0xff]
  %v62 = vld [vmem:[%s1 + $0xe8] sm:$0xff]
  %v63 = vld [vmem:[%s1 + $0xf0] sm:$0xff]
  %v64 = vld [vmem:[%s1 + $0xf8] sm:$0xff]
  %v65 = vld [vmem:[%s1 + $0x100] sm:$0xff]
  %v66 = vld [vmem:[%s1 + $0x108] sm:$0xff]
  %v67 = vld [vmem:[%s1 + $0x110] sm:$0xff]
  %v68 = vld [vmem:[%s1 + $0x118] sm:$0xff]
  %v69 = vld [vmem:[%s1 + $0x120] sm:$0xff]
  %v70 = vld [vmem:[%s1 + $0x128] sm:$0xff]
  %v71 = vld [vmem:[%s1 + $0x130] sm:$0xff]
  %v72 = vld [vmem:[%s1 + $0x138] sm:$0xff]
  %v73 = vld [vmem:[%s1 + $0x140] sm:$0xff]
  %v74 = vld [vmem:[%s1 + $0x148] sm:$0xff]
  %v75 = vld [vmem:[%s1 + $0x150] sm:$0xff]
  %v76 = vld [vmem:[%s1 + $0x158] sm:$0xff]
  %v77 = vld [vmem:[%s1 + $0x160] sm:$0xff]
  %v78 = vld [vmem:[%s1 + $0x168] sm:$0xff]
  %v79 = vld [vmem:[%s1 + $0x170] sm:$0xff]
  %v80 = vld [vmem:[%s1 + $0x178] sm:$0xff]
  %v81 = vld [vmem:[%s1 + $0x180] sm:$0xff]
  %v82 = vld [vmem:[%s1 + $0x188] sm:$0xff]
  %v83 = vld [vmem:[%s1 + $0x190] sm:$0xff]
  %v84 = vld [vmem:[%s1 + $0x198] sm:$0xff]
  %v85 = vld [vmem:[%s1 + $0x1a0] sm:$0xff]
  %v86 = vld [vmem:[%s1 + $0x1a8] sm:$0xff]
  %v87 = vld [vmem:[%s1 + $0x1b0] sm:$0xff]
  %v88 = vld [vmem:[%s1 + $0x1b8] sm:$0xff]
  %v89 = vld [vmem:[%s1 + $0x1c0] sm:$0xff]
  %v90 = vld [vmem:[%s1 + $0x1c8] sm:$0xff]
  %v91 = vld [vmem:[%s1 + $0x1d0] sm:$0xff]
  %v92 = vld [vmem:[%s1 + $0x1d8] sm:$0xff]
  %v93 = vld [vmem:[%s1 + $0x1e0] sm:$0xff]
  %v94 = vld [vmem:[%s1 + $0x1e8] sm:$0xff]
  %v95 = vld [vmem:[%s1 + $0x1f0] sm:$0xff]
  %v96 = vld [vmem:[%s1 + $0x1f8] sm:$0xff]
  %v97 = vld [vmem:[%s1 + $0x200] sm:$0xff]
  %v98 = vld [vmem:[%s1 + $0x208] sm:$0xff]
  %v99 = vld [vmem:[%s1 + $0x210] sm:$0xff]
  %v100 = vld [vmem:[%s1 + $0x218] sm:$0xff]
  %v101 = vld [vmem:[%s1 + $0x220] sm:$0xff]
  %v102 = vld [vmem:[%s1 + $0x228] sm:$0xff]
  %v103 = vld [vmem:[%s1 + $0x230] sm:$0xff]
  %v104 = vld [vmem:[%s1 + $0x238] sm:$0xff]
  %v105 = vld [vmem:[%s1 + $0x240] sm:$0xff]
  %v106 = vld [vmem:[%s1 + $0x248] sm:$0xff]
  %v107 = vld [vmem:[%s1 + $0x250] sm:$0xff]
  %v108 = vld [vmem:[%s1 + $0x258] sm:$0xff]
  %v109 = vld [vmem:[%s1 + $0x260] sm:$0xff]
  %v110 = vld [vmem:[%s1 + $0x268] sm:$0xff]
  %v111 = vld [vmem:[%s1 + $0x270] sm:$0xff]
  %v112 = vld [vmem:[%s1 + $0x278] sm:$0xff]
  %v113 = vld [vmem:[%s1 + $0x280] sm:$0xff]
  %v114 = vld [vmem:[%s1 + $0x288] sm:$0xff]
  %v115 = vld [vmem:[%s1 + $0x290] sm:$0xff]
  %v116 = vld [vmem:[%s1 + $0x298] sm:$0xff]
  %v117 = vld [vmem:[%s1 + $0x2a0] sm:$0xff]
  %v118 = vld [vmem:[%s1 + $0x2a8] sm:$0xff]
  %v119 = vld [vmem:[%s1 + $0x2b0] sm:$0xff]
  %v120 = vld [vmem:[%s1 + $0x2b8] sm:$0xff]
  %v121 = vld [vmem:[%s1 + $0x2c0] sm:$0xff]
  %v122 = vld [vmem:[%s1 + $0x2c8] sm:$0xff]
  %v123 = vld [vmem:[%s1 + $0x2d0] sm:$0xff]
  %v124 = vld [vmem:[%s1 + $0x2d8] sm:$0xff]
  %v125 = vld [vmem:[%s1 + $0x2e0] sm:$0xff]
  %v126 = vld [vmem:[%s1 + $0x2e8] sm:$0xff]
  %v127 = vld [vmem:[%s1 + $0x2f0] sm:$0xff]
  %v128 = vld [vmem:[%s1 + $0x2f8] sm:$0xff]
  %v129 = vld [vmem:[%s1 + $0x300] sm:$0xff]
  %v130 = vld [vmem:[%s1 + $0x308] sm:$0xff]
  %v131 = vld [vmem:[%s1 + $0x310] sm:$0xff]
  %v132 = vld [vmem:[%s1 + $0x318] sm:$0xff]
  %v133 = vld [vmem:[%s1 + $0x320] sm:$0xff]
  %v134 = vld [vmem:[%s1 + $0x328] sm:$0xff]
  %v135 = vld [vmem:[%s1 + $0x330] sm:$0xff]
  %v136 = vld [vmem:[%s1 + $0x338] sm:$0xff]
  %v137 = vld [vmem:[%s1 + $0x340] sm:$0xff]
  %v138 = vld [vmem:[%s1 + $0x348] sm:$0xff]
  %v139 = vld [vmem:[%s1 + $0x350] sm:$0xff]
  %v140 = vld [vmem:[%s1 + $0x358] sm:$0xff]
  %v141 = vld [vmem:[%s1 + $0x360] sm:$0xff]
  %v142 = vld [vmem:[%s1 + $0x368] sm:$0xff]
  %v143 = vld [vmem:[%s1 + $0x370] sm:$0xff]
  %v144 = vld [vmem:[%s1 + $0x378] sm:$0xff]
  %v145 = vld [vmem:[%s1 + $0x380] sm:$0xff]
  %v146 = vld [vmem:[%s1 + $0x388] sm:$0xff]
  %v147 = vld [vmem:[%s1 + $0x390] sm:$0xff]
  %v148 = vld [vmem:[%s1 + $0x398] sm:$0xff]
  %v149 = vld [vmem:[%s1 + $0x3a0] sm:$0xff]
  %v150 = vld [vmem:[%s1 + $0x3a8] sm:$0xff]
  %v151 = vld [vmem:[%s1 + $0x3b0] sm:$0xff]
  %v152 = vld [vmem:[%s1 + $0x3b8] sm:$0xff]
  %v153 = vld [vmem:[%s1 + $0x3c0] sm:$0xff]
  %v154 = vld [vmem:[%s1 + $0x3c8] sm:$0xff]
  %v155 = vld [vmem:[%s1 + $0x3d0] sm:$0xff]
  %v156 = vld [vmem:[%s1 + $0x3d8] sm:$0xff]
  %v157 = vld [vmem:[%s1 + $0x3e0] sm:$0xff]
  %v158 = vld [vmem:[%s1 + $0x3e8] sm:$0xff]
  %v159 = vld [vmem:[%s1 + $0x3f0] sm:$0xff]
  %v160 = vld [vmem:[%s1 + $0x3f8] sm:$0xff]
  %v161 = vld [vmem:[%s1 + $0x400] sm:$0xff]
  %v162 = vld [vmem:[%s1 + $0x408] sm:$0xff]
  %v163 = vld [vmem:[%s1 + $0x410] sm:$0xff]
  %v164 = vld [vmem:[%s1 + $0x418] sm:$0xff]
  %v165 = vld [vmem:[%s1 + $0x420] sm:$0xff]
  %v166 = vld [vmem:[%s1 + $0x428] sm:$0xff]
  %v167 = vld [vmem:[%s1 + $0x430] sm:$0xff]
  %v168 = vld [vmem:[%s1 + $0x438] sm:$0xff]
  %v169 = vld [vmem:[%s1 + $0x440] sm:$0xff]
  %v170 = vld [vmem:[%s1 + $0x448] sm:$0xff]
  %v171 = vld [vmem:[%s1 + $0x450] sm:$0xff]
  %v172 = vld [vmem:[%s1 + $0x458] sm:$0xff]
  %v173 = vld [vmem:[%s1 + $0x460] sm:$0xff]
  %v174 = vld [vmem:[%s1 + $0x468] sm:$0xff]
  %v175 = vld [vmem:[%s1 + $0x470] sm:$0xff]
  %v176 = vld [vmem:[%s1 + $0x478] sm:$0xff]
  %v177 = vld [vmem:[%s1 + $0x480] sm:$0xff]
  %v178 = vld [vmem:[%s1 + $0x488] sm:$0xff]
  %v179 = vld [vmem:[%s1 + $0x490] sm:$0xff]
  %v180 = vld [vmem:[%s1 + $0x498] sm:$0xff]
  %v181 = vld [vmem:[%s1 + $0x4a0] sm:$0xff]
  %v182 = vld [vmem:[%s1 + $0x4a8] sm:$0xff]
  %v183 = vld [vmem:[%s1 + $0x4b0] sm:$0xff]
  %v184 = vld [vmem:[%s1 + $0x4b8] sm:$0xff]
  %v185 = vld [vmem:[%s1 + $0x4c0] sm:$0xff]
  %v186 = vld [vmem:[%s1 + $0x4c8] sm:$0xff]
  %v187 = vld [vmem:[%s1 + $0x4d0] sm:$0xff]
  %v188 = vld [vmem:[%s1 + $0x4d8] sm:$0xff]
  %v189 = vld [vmem:[%s1 + $0x4e0] sm:$0xff]
  %v190 = vld [vmem:[%s1 + $0x4e8] sm:$0xff]
  %v191 = vld [vmem:[%s1 + $0x4f0] sm:$0xff]
  %v192 = vld [vmem:[%s1 + $0x4f8] sm:$0xff]
  %v193 = vld [vmem:[%s1 + $0x500] sm:$0xff]
  %v194 = vld [vmem:[%s1 + $0x508] sm:$0xff]
  %v195 = vld [vmem:[%s1 + $0x510] sm:$0xff]
  %v196 = vld [vmem:[%s1 + $0x518] sm:$0xff]
  %v197 = vld [vmem:[%s1 + $0x520] sm:$0xff]
  %v198 = vld [vmem:[%s1 + $0x528] sm:$0xff]
  %v199 = vld [vmem:[%s1 + $0x530] sm:$0xff]
  %v200 = vld [vmem:[%s1 + $0x538] sm:$0xff]
  %v201 = vld [vmem:[%s1 + $0x540] sm:$0xff]
  %v202 = vld [vmem:[%s1 + $0x548] sm:$0xff]
  %v203 = vld [vmem:[%s1 + $0x550] sm:$0xff]
  %v204 = vld [vmem:[%s1 + $0x558] sm:$0xff]
  %v205 = vld [vmem:[%s1 + $0x560] sm:$0xff]
  %v206 = vld [vmem:[%s1 + $0x568] sm:$0xff]
  %v207 = vld [vmem:[%s1 + $0x570] sm:$0xff]
  %v208 = vld [vmem:[%s1 + $0x578] sm:$0xff]
  %v209 = vld [vmem:[%s1 + $0x580] sm:$0xff]
  %v210 = vld [vmem:[%s1 + $0x588] sm:$0xff]
  %v211 = vld [vmem:[%s1 + $0x590] sm:$0xff]
  %v212 = vld [vmem:[%s1 + $0x598] sm:$0xff]
  %v213 = vld [vmem:[%s1 + $0x5a0] sm:$0xff]
  %v214 = vld [vmem:[%s1 + $0x5a8] sm:$0xff]
  %v215 = vld [vmem:[%s1 + $0x5b0] sm:$0xff]
  %v216 = vld [vmem:[%s1 + $0x5b8] sm:$0xff]
  %v217 = vld [vmem:[%s1 + $0x5c0] sm:$0xff]
  %v218 = vld [vmem:[%s1 + $0x5c8] sm:$0xff]
  %v219 = vld [vmem:[%s1 + $0x5d0] sm:$0xff]
  %v220 = vld [vmem:[%s1 + $0x5d8] sm:$0xff]
  %v221 = vld [vmem:[%s1 + $0x5e0] sm:$0xff]
  %v222 = vld [vmem:[%s1 + $0x5e8] sm:$0xff]
  %v223 = vld [vmem:[%s1 + $0x5f0] sm:$0xff]
  %v224 = vld [vmem:[%s1 + $0x5f8] sm:$0xff]
  %v225 = vld [vmem:[%s1 + $0x600] sm:$0xff]
  %v226 = vld [vmem:[%s1 + $0x608] sm:$0xff]
  %v227 = vld [vmem:[%s1 + $0x610] sm:$0xff]
  %v228 = vld [vmem:[%s1 + $0x618] sm:$0xff]
  %v229 = vld [vmem:[%s1 + $0x620] sm:$0xff]
  %v230 = vld [vmem:[%s1 + $0x628] sm:$0xff]
  %v231 = vld [vmem:[%s1 + $0x630] sm:$0xff]
  %v232 = vld [vmem:[%s1 + $0x638] sm:$0xff]
  %v233 = vld [vmem:[%s1 + $0x640] sm:$0xff]
  %v234 = vld [vmem:[%s1 + $0x648] sm:$0xff]
  %v235 = vld [vmem:[%s1 + $0x650] sm:$0xff]
  %v236 = vld [vmem:[%s1 + $0x658] sm:$0xff]
  %v237 = vld [vmem:[%s1 + $0x660] sm:$0xff]
  %v238 = vld [vmem:[%s1 + $0x668] sm:$0xff]
  %v239 = vld [vmem:[%s1 + $0x670] sm:$0xff]
  %v240 = vld [vmem:[%s1 + $0x678] sm:$0xff]
  %v241 = vld [vmem:[%s1 + $0x680] sm:$0xff]
  %v242 = vld [vmem:[%s1 + $0x688] sm:$0xff]
  %v243 = vld [vmem:[%s1 + $0x690] sm:$0xff]
  %v244 = vld [vmem:[%s1 + $0x698] sm:$0xff]
  %v245 = vld [vmem:[%s1 + $0x6a0] sm:$0xff]
  %v246 = vld [vmem:[%s1 + $0x6a8] sm:$0xff]
  %v247 = vld [vmem:[%s1 + $0x6b0] sm:$0xff]
  %v248 = vld [vmem:[%s1 + $0x6b8] sm:$0xff]
  %v249 = vld [vmem:[%s1 + $0x6c0] sm:$0xff]
  %v250 = vld [vmem:[%s1 + $0x6c8] sm:$0xff]
  %v251 = vld [vmem:[%s1 + $0x6d0] sm:$0xff]
  %v252 = vld [vmem:[%s1 + $0x6d8] sm:$0xff]
  %v253 = vld [vmem:[%s1 + $0x6e0] sm:$0xff]
  %v254 = vld [vmem:[%s1 + $0x6e8] sm:$0xff]
  %v255 = vld [vmem:[%s1 + $0x6f0] sm:$0xff]
  %v256 = vld [vmem:[%s1 + $0x6f8] sm:$0xff]
  %v257 = vld [vmem:[%s1 + $0x700] sm:$0xff]
  %v258 = vld [vmem:[%s1 + $0x708] sm:$0xff]
  %v259 = vld [vmem:[%s1 + $0x710] sm:$0xff]
  %v260 = vld [vmem:[%s1 + $0x718] sm:$0xff]
  %v261 = vld [vmem:[%s1 + $0x720] sm:$0xff]
  %v262 = vld [vmem:[%s1 + $0x728] sm:$0xff]
  %v263 = vld [vmem:[%s1 + $0x730] sm:$0xff]
  %v264 = vld [vmem:[%s1 + $0x738] sm:$0xff]
  %v265 = vld [vmem:[%s1 + $0x740] sm:$0xff]
  %v266 = vld [vmem:[%s1 + $0x748] sm:$0xff]
  %v267 = vld [vmem:[%s1 + $0x750] sm:$0xff]
  %v268 = vld [vmem:[%s1 + $0x758] sm:$0xff]
  %v269 = vld [vmem:[%s1 + $0x760] sm:$0xff]
  %v270 = vld [vmem:[%s1 + $0x768] sm:$0xff]
  %v271 = vld [vmem:[%s1 + $0x770] sm:$0xff]
  %v272 = vld [vmem:[%s1 + $0x778] sm:$0xff]
  %v273 = vld [vmem:[%s1 + $0x780] sm:$0xff]
  %v274 = vld [vmem:[%s1 + $0x788] sm:$0xff]
  %v275 = vld [vmem:[%s1 + $0x790] sm:$0xff]
  %v276 = vld [vmem:[%s1 + $0x798] sm:$0xff]
  %v277 = vld [vmem:[%s1 + $0x7a0] sm:$0xff]
  %v278 = vld [vmem:[%s1 + $0x7a8] sm:$0xff]
  %v279 = vld [vmem:[%s1 + $0x7b0] sm:$0xff]
  %v280 = vld [vmem:[%s1 + $0x7b8] sm:$0xff]
  %v281 = vld [vmem:[%s1 + $0x7c0] sm:$0xff]
  %v282 = vld [vmem:[%s1 + $0x7c8] sm:$0xff]
  %v283 = vld [vmem:[%s1 + $0x7d0] sm:$0xff]
  %v284 = vld [vmem:[%s1 + $0x7d8] sm:$0xff]
  %v285 = vld [vmem:[%s1 + $0x7e0] sm:$0xff]
  %v286 = vld [vmem:[%s1 + $0x7e8] sm:$0xff]
  %v287 = vld [vmem:[%s1 + $0x7f0] sm:$0xff]
  %v288 = vld [vmem:[%s1 + $0x7f8] sm:$0xff]
  %v289 = vld [vmem:[%s2] sm:$0x1]
  %v291 = vlaneseq
  %v292 = vshrl.u32 %v291, 7
  %v293 = vsub.s32 0, %v292
  %v294 = vrot.slane %v289, %v293
  %296 = vmatprep.subr.mxu0 0.0
  %297 = vmatpush1.msra.mxu0 %v33
  %298 = vmatprep.subr.mxu0 0.0
  %299 = vmatpush1.msra.mxu0 %v34
  %300 = vmatprep.subr.mxu0 0.0
  %301 = vmatpush1.msra.mxu0 %v35
  %302 = vmatprep.subr.mxu0 0.0
  %303 = vmatpush1.msra.mxu0 %v36
  %304 = vmatprep.subr.mxu0 0.0
  %305 = vmatpush1.msra.mxu0 %v37
  %306 = vmatprep.subr.mxu0 0.0
  %307 = vmatpush1.msra.mxu0 %v38
  %308 = vmatprep.subr.mxu0 0.0
  %309 = vmatpush1.msra.mxu0 %v39
  %310 = vmatprep.subr.mxu0 0.0
  %311 = vmatpush1.msra.mxu0 %v40
  %312 = vmatprep.subr.mxu0 0.0
  %313 = vmatpush1.msra.mxu0 %v41
  %314 = vmatprep.subr.mxu0 0.0
  %315 = vmatpush1.msra.mxu0 %v42
  %316 = vmatprep.subr.mxu0 0.0
  %317 = vmatpush1.msra.mxu0 %v43
  %318 = vmatprep.subr.mxu0 0.0
  %319 = vmatpush1.msra.mxu0 %v44
  %320 = vmatprep.subr.mxu0 0.0
  %321 = vmatpush1.msra.mxu0 %v45
  %322 = vmatprep.subr.mxu0 0.0
  %323 = vmatpush1.msra.mxu0 %v46
  %324 = vmatprep.subr.mxu0 0.0
  %325 = vmatpush1.msra.mxu0 %v47
  %326 = vmatprep.subr.mxu0 0.0
  %327 = vmatpush1.msra.mxu0 %v48
  %328 = vmatprep.subr.mxu0 0.0
  %329 = vmatpush1.msra.mxu0 %v49
  %330 = vmatprep.subr.mxu0 0.0
  %331 = vmatpush1.msra.mxu0 %v50
  %332 = vmatprep.subr.mxu0 0.0
  %333 = vmatpush1.msra.mxu0 %v51
  %334 = vmatprep.subr.mxu0 0.0
  %335 = vmatpush1.msra.mxu0 %v52
  %336 = vmatprep.subr.mxu0 0.0
  %337 = vmatpush1.msra.mxu0 %v53
  %338 = vmatprep.subr.mxu0 0.0
  %339 = vmatpush1.msra.mxu0 %v54
  %340 = vmatprep.subr.mxu0 0.0
  %341 = vmatpush1.msra.mxu0 %v55
  %342 = vmatprep.subr.mxu0 0.0
  %343 = vmatpush1.msra.mxu0 %v56
  %344 = vmatprep.subr.mxu0 0.0
  %345 = vmatpush1.msra.mxu0 %v57
  %346 = vmatprep.subr.mxu0 0.0
  %347 = vmatpush1.msra.mxu0 %v58
  %348 = vmatprep.subr.mxu0 0.0
  %349 = vmatpush1.msra.mxu0 %v59
  %350 = vmatprep.subr.mxu0 0.0
  %351 = vmatpush1.msra.mxu0 %v60
  %352 = vmatprep.subr.mxu0 0.0
  %353 = vmatpush1.msra.mxu0 %v61
  %354 = vmatprep.subr.mxu0 0.0
  %355 = vmatpush1.msra.mxu0 %v62
  %356 = vmatprep.subr.mxu0 0.0
  %357 = vmatpush1.msra.mxu0 %v63
  %358 = vmatprep.subr.mxu0 0.0
  %359 = vmatpush1.msra.mxu0 %v64
  %360 = vmatprep.mubr.f32.mxu0 %v18
  %361 = vmatmul.mubr.f32.gmra.mrb[0].mxu0 %v17
  %v362 = vpop.f32.mrb[0].mxu0
  %v363 = vadd.f32 %v294, %v362
  %v364 = vpop.f32.mrb[0].mxu0
  %365 = vdwg.mxu0
  %366 = vmatprep.subr.mxu0 0.0
  %367 = vmatpush1.msra.mxu0 %v65
  %368 = vmatprep.subr.mxu0 0.0
  %369 = vmatpush1.msra.mxu0 %v66
  %370 = vmatprep.subr.mxu0 0.0
  %371 = vmatpush1.msra.mxu0 %v67
  %372 = vmatprep.subr.mxu0 0.0
  %373 = vmatpush1.msra.mxu0 %v68
  %374 = vmatprep.subr.mxu0 0.0
  %375 = vmatpush1.msra.mxu0 %v69
  %376 = vmatprep.subr.mxu0 0.0
  %377 = vmatpush1.msra.mxu0 %v70
  %378 = vmatprep.subr.mxu0 0.0
  %379 = vmatpush1.msra.mxu0 %v71
  %380 = vmatprep.subr.mxu0 0.0
  %381 = vmatpush1.msra.mxu0 %v72
  %382 = vmatprep.subr.mxu0 0.0
  %383 = vmatpush1.msra.mxu0 %v73
  %384 = vmatprep.subr.mxu0 0.0
  %385 = vmatpush1.msra.mxu0 %v74
  %386 = vmatprep.subr.mxu0 0.0
  %387 = vmatpush1.msra.mxu0 %v75
  %388 = vmatprep.subr.mxu0 0.0
  %389 = vmatpush1.msra.mxu0 %v76
  %390 = vmatprep.subr.mxu0 0.0
  %391 = vmatpush1.msra.mxu0 %v77
  %392 = vmatprep.subr.mxu0 0.0
  %393 = vmatpush1.msra.mxu0 %v78
  %394 = vmatprep.subr.mxu0 0.0
  %395 = vmatpush1.msra.mxu0 %v79
  %396 = vmatprep.subr.mxu0 0.0
  %397 = vmatpush1.msra.mxu0 %v80
  %398 = vmatprep.subr.mxu0 0.0
  %399 = vmatpush1.msra.mxu0 %v81
  %400 = vmatprep.subr.mxu0 0.0
  %401 = vmatpush1.msra.mxu0 %v82
  %402 = vmatprep.subr.mxu0 0.0
  %403 = vmatpush1.msra.mxu0 %v83
  %404 = vmatprep.subr.mxu0 0.0
  %405 = vmatpush1.msra.mxu0 %v84
  %406 = vmatprep.subr.mxu0 0.0
  %407 = vmatpush1.msra.mxu0 %v85
  %408 = vmatprep.subr.mxu0 0.0
  %409 = vmatpush1.msra.mxu0 %v86
  %410 = vmatprep.subr.mxu0 0.0
  %411 = vmatpush1.msra.mxu0 %v87
  %412 = vmatprep.subr.mxu0 0.0
  %413 = vmatpush1.msra.mxu0 %v88
  %414 = vmatprep.subr.mxu0 0.0
  %415 = vmatpush1.msra.mxu0 %v89
  %416 = vmatprep.subr.mxu0 0.0
  %417 = vmatpush1.msra.mxu0 %v90
  %418 = vmatprep.subr.mxu0 0.0
  %419 = vmatpush1.msra.mxu0 %v91
  %420 = vmatprep.subr.mxu0 0.0
  %421 = vmatpush1.msra.mxu0 %v92
  %422 = vmatprep.subr.mxu0 0.0
  %423 = vmatpush1.msra.mxu0 %v93
  %424 = vmatprep.subr.mxu0 0.0
  %425 = vmatpush1.msra.mxu0 %v94
  %426 = vmatprep.subr.mxu0 0.0
  %427 = vmatpush1.msra.mxu0 %v95
  %428 = vmatprep.subr.mxu0 0.0
  %429 = vmatpush1.msra.mxu0 %v96
  %430 = vmatprep.mubr.f32.mxu0 %v20
  %431 = vmatmul.mubr.f32.gmra.mrb[0].mxu0 %v19
  %v432 = vpop.f32.mrb[0].mxu0
  %v433 = vadd.f32 %v363, %v432
  %v434 = vpop.f32.mrb[0].mxu0
  %435 = vdwg.mxu0
  %436 = vmatprep.subr.mxu0 0.0
  %437 = vmatpush1.msra.mxu0 %v97
  %438 = vmatprep.subr.mxu0 0.0
  %439 = vmatpush1.msra.mxu0 %v98
  %440 = vmatprep.subr.mxu0 0.0
  %441 = vmatpush1.msra.mxu0 %v99
  %442 = vmatprep.subr.mxu0 0.0
  %443 = vmatpush1.msra.mxu0 %v100
  %444 = vmatprep.subr.mxu0 0.0
  %445 = vmatpush1.msra.mxu0 %v101
  %446 = vmatprep.subr.mxu0 0.0
  %447 = vmatpush1.msra.mxu0 %v102
  %448 = vmatprep.subr.mxu0 0.0
  %449 = vmatpush1.msra.mxu0 %v103
  %450 = vmatprep.subr.mxu0 0.0
  %451 = vmatpush1.msra.mxu0 %v104
  %452 = vmatprep.subr.mxu0 0.0
  %453 = vmatpush1.msra.mxu0 %v105
  %454 = vmatprep.subr.mxu0 0.0
  %455 = vmatpush1.msra.mxu0 %v106
  %456 = vmatprep.subr.mxu0 0.0
  %457 = vmatpush1.msra.mxu0 %v107
  %458 = vmatprep.subr.mxu0 0.0
  %459 = vmatpush1.msra.mxu0 %v108
  %460 = vmatprep.subr.mxu0 0.0
  %461 = vmatpush1.msra.mxu0 %v109
  %462 = vmatprep.subr.mxu0 0.0
  %463 = vmatpush1.msra.mxu0 %v110
  %464 = vmatprep.subr.mxu0 0.0
  %465 = vmatpush1.msra.mxu0 %v111
  %466 = vmatprep.subr.mxu0 0.0
  %467 = vmatpush1.msra.mxu0 %v112
  %468 = vmatprep.subr.mxu0 0.0
  %469 = vmatpush1.msra.mxu0 %v113
  %470 = vmatprep.subr.mxu0 0.0
  %471 = vmatpush1.msra.mxu0 %v114
  %472 = vmatprep.subr.mxu0 0.0
  %473 = vmatpush1.msra.mxu0 %v115
  %474 = vmatprep.subr.mxu0 0.0
  %475 = vmatpush1.msra.mxu0 %v116
  %476 = vmatprep.subr.mxu0 0.0
  %477 = vmatpush1.msra.mxu0 %v117
  %478 = vmatprep.subr.mxu0 0.0
  %479 = vmatpush1.msra.mxu0 %v118
  %480 = vmatprep.subr.mxu0 0.0
  %481 = vmatpush1.msra.mxu0 %v119
  %482 = vmatprep.subr.mxu0 0.0
  %483 = vmatpush1.msra.mxu0 %v120
  %484 = vmatprep.subr.mxu0 0.0
  %485 = vmatpush1.msra.mxu0 %v121
  %486 = vmatprep.subr.mxu0 0.0
  %487 = vmatpush1.msra.mxu0 %v122
  %488 = vmatprep.subr.mxu0 0.0
  %489 = vmatpush1.msra.mxu0 %v123
  %490 = vmatprep.subr.mxu0 0.0
  %491 = vmatpush1.msra.mxu0 %v124
  %492 = vmatprep.subr.mxu0 0.0
  %493 = vmatpush1.msra.mxu0 %v125
  %494 = vmatprep.subr.mxu0 0.0
  %495 = vmatpush1.msra.mxu0 %v126
  %496 = vmatprep.subr.mxu0 0.0
  %497 = vmatpush1.msra.mxu0 %v127
  %498 = vmatprep.subr.mxu0 0.0
  %499 = vmatpush1.msra.mxu0 %v128
  %500 = vmatprep.mubr.f32.mxu0 %v22
  %501 = vmatmul.mubr.f32.gmra.mrb[0].mxu0 %v21
  %v502 = vpop.f32.mrb[0].mxu0
  %v503 = vadd.f32 %v433, %v502
  %v504 = vpop.f32.mrb[0].mxu0
  %505 = vdwg.mxu0
  %506 = vmatprep.subr.mxu0 0.0
  %507 = vmatpush1.msra.mxu0 %v129
  %508 = vmatprep.subr.mxu0 0.0
  %509 = vmatpush1.msra.mxu0 %v130
  %510 = vmatprep.subr.mxu0 0.0
  %511 = vmatpush1.msra.mxu0 %v131
  %512 = vmatprep.subr.mxu0 0.0
  %513 = vmatpush1.msra.mxu0 %v132
  %514 = vmatprep.subr.mxu0 0.0
  %515 = vmatpush1.msra.mxu0 %v133
  %516 = vmatprep.subr.mxu0 0.0
  %517 = vmatpush1.msra.mxu0 %v134
  %518 = vmatprep.subr.mxu0 0.0
  %519 = vmatpush1.msra.mxu0 %v135
  %520 = vmatprep.subr.mxu0 0.0
  %521 = vmatpush1.msra.mxu0 %v136
  %522 = vmatprep.subr.mxu0 0.0
  %523 = vmatpush1.msra.mxu0 %v137
  %524 = vmatprep.subr.mxu0 0.0
  %525 = vmatpush1.msra.mxu0 %v138
  %526 = vmatprep.subr.mxu0 0.0
  %527 = vmatpush1.msra.mxu0 %v139
  %528 = vmatprep.subr.mxu0 0.0
  %529 = vmatpush1.msra.mxu0 %v140
  %530 = vmatprep.subr.mxu0 0.0
  %531 = vmatpush1.msra.mxu0 %v141
  %532 = vmatprep.subr.mxu0 0.0
  %533 = vmatpush1.msra.mxu0 %v142
  %534 = vmatprep.subr.mxu0 0.0
  %535 = vmatpush1.msra.mxu0 %v143
  %536 = vmatprep.subr.mxu0 0.0
  %537 = vmatpush1.msra.mxu0 %v144
  %538 = vmatprep.subr.mxu0 0.0
  %539 = vmatpush1.msra.mxu0 %v145
  %540 = vmatprep.subr.mxu0 0.0
  %541 = vmatpush1.msra.mxu0 %v146
  %542 = vmatprep.subr.mxu0 0.0
  %543 = vmatpush1.msra.mxu0 %v147
  %544 = vmatprep.subr.mxu0 0.0
  %545 = vmatpush1.msra.mxu0 %v148
  %546 = vmatprep.subr.mxu0 0.0
  %547 = vmatpush1.msra.mxu0 %v149
  %548 = vmatprep.subr.mxu0 0.0
  %549 = vmatpush1.msra.mxu0 %v150
  %550 = vmatprep.subr.mxu0 0.0
  %551 = vmatpush1.msra.mxu0 %v151
  %552 = vmatprep.subr.mxu0 0.0
  %553 = vmatpush1.msra.mxu0 %v152
  %554 = vmatprep.subr.mxu0 0.0
  %555 = vmatpush1.msra.mxu0 %v153
  %556 = vmatprep.subr.mxu0 0.0
  %557 = vmatpush1.msra.mxu0 %v154
  %558 = vmatprep.subr.mxu0 0.0
  %559 = vmatpush1.msra.mxu0 %v155
  %560 = vmatprep.subr.mxu0 0.0
  %561 = vmatpush1.msra.mxu0 %v156
  %562 = vmatprep.subr.mxu0 0.0
  %563 = vmatpush1.msra.mxu0 %v157
  %564 = vmatprep.subr.mxu0 0.0
  %565 = vmatpush1.msra.mxu0 %v158
  %566 = vmatprep.subr.mxu0 0.0
  %567 = vmatpush1.msra.mxu0 %v159
  %568 = vmatprep.subr.mxu0 0.0
  %569 = vmatpush1.msra.mxu0 %v160
  %570 = vmatprep.mubr.f32.mxu0 %v24
  %571 = vmatmul.mubr.f32.gmra.mrb[0].mxu0 %v23
  %v572 = vpop.f32.mrb[0].mxu0
  %v573 = vadd.f32 %v503, %v572
  %v574 = vpop.f32.mrb[0].mxu0
  %575 = vdwg.mxu0
  %576 = vmatprep.subr.mxu0 0.0
  %577 = vmatpush1.msra.mxu0 %v161
  %578 = vmatprep.subr.mxu0 0.0
  %579 = vmatpush1.msra.mxu0 %v162
  %580 = vmatprep.subr.mxu0 0.0
  %581 = vmatpush1.msra.mxu0 %v163
  %582 = vmatprep.subr.mxu0 0.0
  %583 = vmatpush1.msra.mxu0 %v164
  %584 = vmatprep.subr.mxu0 0.0
  %585 = vmatpush1.msra.mxu0 %v165
  %586 = vmatprep.subr.mxu0 0.0
  %587 = vmatpush1.msra.mxu0 %v166
  %588 = vmatprep.subr.mxu0 0.0
  %589 = vmatpush1.msra.mxu0 %v167
  %590 = vmatprep.subr.mxu0 0.0
  %591 = vmatpush1.msra.mxu0 %v168
  %592 = vmatprep.subr.mxu0 0.0
  %593 = vmatpush1.msra.mxu0 %v169
  %594 = vmatprep.subr.mxu0 0.0
  %595 = vmatpush1.msra.mxu0 %v170
  %596 = vmatprep.subr.mxu0 0.0
  %597 = vmatpush1.msra.mxu0 %v171
  %598 = vmatprep.subr.mxu0 0.0
  %599 = vmatpush1.msra.mxu0 %v172
  %600 = vmatprep.subr.mxu0 0.0
  %601 = vmatpush1.msra.mxu0 %v173
  %602 = vmatprep.subr.mxu0 0.0
  %603 = vmatpush1.msra.mxu0 %v174
  %604 = vmatprep.subr.mxu0 0.0
  %605 = vmatpush1.msra.mxu0 %v175
  %606 = vmatprep.subr.mxu0 0.0
  %607 = vmatpush1.msra.mxu0 %v176
  %608 = vmatprep.subr.mxu0 0.0
  %609 = vmatpush1.msra.mxu0 %v177
  %610 = vmatprep.subr.mxu0 0.0
  %611 = vmatpush1.msra.mxu0 %v178
  %612 = vmatprep.subr.mxu0 0.0
  %613 = vmatpush1.msra.mxu0 %v179
  %614 = vmatprep.subr.mxu0 0.0
  %615 = vmatpush1.msra.mxu0 %v180
  %616 = vmatprep.subr.mxu0 0.0
  %617 = vmatpush1.msra.mxu0 %v181
  %618 = vmatprep.subr.mxu0 0.0
  %619 = vmatpush1.msra.mxu0 %v182
  %620 = vmatprep.subr.mxu0 0.0
  %621 = vmatpush1.msra.mxu0 %v183
  %622 = vmatprep.subr.mxu0 0.0
  %623 = vmatpush1.msra.mxu0 %v184
  %624 = vmatprep.subr.mxu0 0.0
  %625 = vmatpush1.msra.mxu0 %v185
  %626 = vmatprep.subr.mxu0 0.0
  %627 = vmatpush1.msra.mxu0 %v186
  %628 = vmatprep.subr.mxu0 0.0
  %629 = vmatpush1.msra.mxu0 %v187
  %630 = vmatprep.subr.mxu0 0.0
  %631 = vmatpush1.msra.mxu0 %v188
  %632 = vmatprep.subr.mxu0 0.0
  %633 = vmatpush1.msra.mxu0 %v189
  %634 = vmatprep.subr.mxu0 0.0
  %635 = vmatpush1.msra.mxu0 %v190
  %636 = vmatprep.subr.mxu0 0.0
  %637 = vmatpush1.msra.mxu0 %v191
  %638 = vmatprep.subr.mxu0 0.0
  %639 = vmatpush1.msra.mxu0 %v192
  %640 = vmatprep.mubr.f32.mxu0 %v26
  %641 = vmatmul.mubr.f32.gmra.mrb[0].mxu0 %v25
  %v642 = vpop.f32.mrb[0].mxu0
  %v643 = vadd.f32 %v573, %v642
  %v644 = vpop.f32.mrb[0].mxu0
  %645 = vdwg.mxu0
  %646 = vmatprep.subr.mxu0 0.0
  %647 = vmatpush1.msra.mxu0 %v193
  %648 = vmatprep.subr.mxu0 0.0
  %649 = vmatpush1.msra.mxu0 %v194
  %650 = vmatprep.subr.mxu0 0.0
  %651 = vmatpush1.msra.mxu0 %v195
  %652 = vmatprep.subr.mxu0 0.0
  %653 = vmatpush1.msra.mxu0 %v196
  %654 = vmatprep.subr.mxu0 0.0
  %655 = vmatpush1.msra.mxu0 %v197
  %656 = vmatprep.subr.mxu0 0.0
  %657 = vmatpush1.msra.mxu0 %v198
  %658 = vmatprep.subr.mxu0 0.0
  %659 = vmatpush1.msra.mxu0 %v199
  %660 = vmatprep.subr.mxu0 0.0
  %661 = vmatpush1.msra.mxu0 %v200
  %662 = vmatprep.subr.mxu0 0.0
  %663 = vmatpush1.msra.mxu0 %v201
  %664 = vmatprep.subr.mxu0 0.0
  %665 = vmatpush1.msra.mxu0 %v202
  %666 = vmatprep.subr.mxu0 0.0
  %667 = vmatpush1.msra.mxu0 %v203
  %668 = vmatprep.subr.mxu0 0.0
  %669 = vmatpush1.msra.mxu0 %v204
  %670 = vmatprep.subr.mxu0 0.0
  %671 = vmatpush1.msra.mxu0 %v205
  %672 = vmatprep.subr.mxu0 0.0
  %673 = vmatpush1.msra.mxu0 %v206
  %674 = vmatprep.subr.mxu0 0.0
  %675 = vmatpush1.msra.mxu0 %v207
  %676 = vmatprep.subr.mxu0 0.0
  %677 = vmatpush1.msra.mxu0 %v208
  %678 = vmatprep.subr.mxu0 0.0
  %679 = vmatpush1.msra.mxu0 %v209
  %680 = vmatprep.subr.mxu0 0.0
  %681 = vmatpush1.msra.mxu0 %v210
  %682 = vmatprep.subr.mxu0 0.0
  %683 = vmatpush1.msra.mxu0 %v211
  %684 = vmatprep.subr.mxu0 0.0
  %685 = vmatpush1.msra.mxu0 %v212
  %686 = vmatprep.subr.mxu0 0.0
  %687 = vmatpush1.msra.mxu0 %v213
  %688 = vmatprep.subr.mxu0 0.0
  %689 = vmatpush1.msra.mxu0 %v214
  %690 = vmatprep.subr.mxu0 0.0
  %691 = vmatpush1.msra.mxu0 %v215
  %692 = vmatprep.subr.mxu0 0.0
  %693 = vmatpush1.msra.mxu0 %v216
  %694 = vmatprep.subr.mxu0 0.0
  %695 = vmatpush1.msra.mxu0 %v217
  %696 = vmatprep.subr.mxu0 0.0
  %697 = vmatpush1.msra.mxu0 %v218
  %698 = vmatprep.subr.mxu0 0.0
  %699 = vmatpush1.msra.mxu0 %v219
  %700 = vmatprep.subr.mxu0 0.0
  %701 = vmatpush1.msra.mxu0 %v220
  %702 = vmatprep.subr.mxu0 0.0
  %703 = vmatpush1.msra.mxu0 %v221
  %704 = vmatprep.subr.mxu0 0.0
  %705 = vmatpush1.msra.mxu0 %v222
  %706 = vmatprep.subr.mxu0 0.0
  %707 = vmatpush1.msra.mxu0 %v223
  %708 = vmatprep.subr.mxu0 0.0
  %709 = vmatpush1.msra.mxu0 %v224
  %710 = vmatprep.mubr.f32.mxu0 %v28
  %711 = vmatmul.mubr.f32.gmra.mrb[0].mxu0 %v27
  %v712 = vpop.f32.mrb[0].mxu0
  %v713 = vadd.f32 %v643, %v712
  %v714 = vpop.f32.mrb[0].mxu0
  %715 = vdwg.mxu0
  %716 = vmatprep.subr.mxu0 0.0
  %717 = vmatpush1.msra.mxu0 %v225
  %718 = vmatprep.subr.mxu0 0.0
  %719 = vmatpush1.msra.mxu0 %v226
  %720 = vmatprep.subr.mxu0 0.0
  %721 = vmatpush1.msra.mxu0 %v227
  %722 = vmatprep.subr.mxu0 0.0
  %723 = vmatpush1.msra.mxu0 %v228
  %724 = vmatprep.subr.mxu0 0.0
  %725 = vmatpush1.msra.mxu0 %v229
  %726 = vmatprep.subr.mxu0 0.0
  %727 = vmatpush1.msra.mxu0 %v230
  %728 = vmatprep.subr.mxu0 0.0
  %729 = vmatpush1.msra.mxu0 %v231
  %730 = vmatprep.subr.mxu0 0.0
  %731 = vmatpush1.msra.mxu0 %v232
  %732 = vmatprep.subr.mxu0 0.0
  %733 = vmatpush1.msra.mxu0 %v233
  %734 = vmatprep.subr.mxu0 0.0
  %735 = vmatpush1.msra.mxu0 %v234
  %736 = vmatprep.subr.mxu0 0.0
  %737 = vmatpush1.msra.mxu0 %v235
  %738 = vmatprep.subr.mxu0 0.0
  %739 = vmatpush1.msra.mxu0 %v236
  %740 = vmatprep.subr.mxu0 0.0
  %741 = vmatpush1.msra.mxu0 %v237
  %742 = vmatprep.subr.mxu0 0.0
  %743 = vmatpush1.msra.mxu0 %v238
  %744 = vmatprep.subr.mxu0 0.0
  %745 = vmatpush1.msra.mxu0 %v239
  %746 = vmatprep.subr.mxu0 0.0
  %747 = vmatpush1.msra.mxu0 %v240
  %748 = vmatprep.subr.mxu0 0.0
  %749 = vmatpush1.msra.mxu0 %v241
  %750 = vmatprep.subr.mxu0 0.0
  %751 = vmatpush1.msra.mxu0 %v242
  %752 = vmatprep.subr.mxu0 0.0
  %753 = vmatpush1.msra.mxu0 %v243
  %754 = vmatprep.subr.mxu0 0.0
  %755 = vmatpush1.msra.mxu0 %v244
  %756 = vmatprep.subr.mxu0 0.0
  %757 = vmatpush1.msra.mxu0 %v245
  %758 = vmatprep.subr.mxu0 0.0
  %759 = vmatpush1.msra.mxu0 %v246
  %760 = vmatprep.subr.mxu0 0.0
  %761 = vmatpush1.msra.mxu0 %v247
  %762 = vmatprep.subr.mxu0 0.0
  %763 = vmatpush1.msra.mxu0 %v248
  %764 = vmatprep.subr.mxu0 0.0
  %765 = vmatpush1.msra.mxu0 %v249
  %766 = vmatprep.subr.mxu0 0.0
  %767 = vmatpush1.msra.mxu0 %v250
  %768 = vmatprep.subr.mxu0 0.0
  %769 = vmatpush1.msra.mxu0 %v251
  %770 = vmatprep.subr.mxu0 0.0
  %771 = vmatpush1.msra.mxu0 %v252
  %772 = vmatprep.subr.mxu0 0.0
  %773 = vmatpush1.msra.mxu0 %v253
  %774 = vmatprep.subr.mxu0 0.0
  %775 = vmatpush1.msra.mxu0 %v254
  %776 = vmatprep.subr.mxu0 0.0
  %777 = vmatpush1.msra.mxu0 %v255
  %778 = vmatprep.subr.mxu0 0.0
  %779 = vmatpush1.msra.mxu0 %v256
  %780 = vmatprep.mubr.f32.mxu0 %v30
  %781 = vmatmul.mubr.f32.gmra.mrb[0].mxu0 %v29
  %v782 = vpop.f32.mrb[0].mxu0
  %v783 = vadd.f32 %v713, %v782
  %v784 = vpop.f32.mrb[0].mxu0
  %785 = vdwg.mxu0
  %786 = vmatprep.subr.mxu0 0.0
  %787 = vmatpush1.msra.mxu0 %v257
  %788 = vmatprep.subr.mxu0 0.0
  %789 = vmatpush1.msra.mxu0 %v258
  %790 = vmatprep.subr.mxu0 0.0
  %791 = vmatpush1.msra.mxu0 %v259
  %792 = vmatprep.subr.mxu0 0.0
  %793 = vmatpush1.msra.mxu0 %v260
  %794 = vmatprep.subr.mxu0 0.0
  %795 = vmatpush1.msra.mxu0 %v261
  %796 = vmatprep.subr.mxu0 0.0
  %797 = vmatpush1.msra.mxu0 %v262
  %798 = vmatprep.subr.mxu0 0.0
  %799 = vmatpush1.msra.mxu0 %v263
  %800 = vmatprep.subr.mxu0 0.0
  %801 = vmatpush1.msra.mxu0 %v264
  %802 = vmatprep.subr.mxu0 0.0
  %803 = vmatpush1.msra.mxu0 %v265
  %804 = vmatprep.subr.mxu0 0.0
  %805 = vmatpush1.msra.mxu0 %v266
  %806 = vmatprep.subr.mxu0 0.0
  %807 = vmatpush1.msra.mxu0 %v267
  %808 = vmatprep.subr.mxu0 0.0
  %809 = vmatpush1.msra.mxu0 %v268
  %810 = vmatprep.subr.mxu0 0.0
  %811 = vmatpush1.msra.mxu0 %v269
  %812 = vmatprep.subr.mxu0 0.0
  %813 = vmatpush1.msra.mxu0 %v270
  %814 = vmatprep.subr.mxu0 0.0
  %815 = vmatpush1.msra.mxu0 %v271
  %816 = vmatprep.subr.mxu0 0.0
  %817 = vmatpush1.msra.mxu0 %v272
  %818 = vmatprep.subr.mxu0 0.0
  %819 = vmatpush1.msra.mxu0 %v273
  %820 = vmatprep.subr.mxu0 0.0
  %821 = vmatpush1.msra.mxu0 %v274
  %822 = vmatprep.subr.mxu0 0.0
  %823 = vmatpush1.msra.mxu0 %v275
  %824 = vmatprep.subr.mxu0 0.0
  %825 = vmatpush1.msra.mxu0 %v276
  %826 = vmatprep.subr.mxu0 0.0
  %827 = vmatpush1.msra.mxu0 %v277
  %828 = vmatprep.subr.mxu0 0.0
  %829 = vmatpush1.msra.mxu0 %v278
  %830 = vmatprep.subr.mxu0 0.0
  %831 = vmatpush1.msra.mxu0 %v279
  %832 = vmatprep.subr.mxu0 0.0
  %833 = vmatpush1.msra.mxu0 %v280
  %834 = vmatprep.subr.mxu0 0.0
  %835 = vmatpush1.msra.mxu0 %v281
  %836 = vmatprep.subr.mxu0 0.0
  %837 = vmatpush1.msra.mxu0 %v282
  %838 = vmatprep.subr.mxu0 0.0
  %839 = vmatpush1.msra.mxu0 %v283
  %840 = vmatprep.subr.mxu0 0.0
  %841 = vmatpush1.msra.mxu0 %v284
  %842 = vmatprep.subr.mxu0 0.0
  %843 = vmatpush1.msra.mxu0 %v285
  %844 = vmatprep.subr.mxu0 0.0
  %845 = vmatpush1.msra.mxu0 %v286
  %846 = vmatprep.subr.mxu0 0.0
  %847 = vmatpush1.msra.mxu0 %v287
  %848 = vmatprep.subr.mxu0 0.0
  %849 = vmatpush1.msra.mxu0 %v288
  %850 = vmatprep.mubr.f32.mxu0 %v32
  %851 = vmatmul.mubr.f32.gmra.mrb[0].mxu0 %v31
  %v852 = vpop.f32.mrb[0].mxu0
  %v853 = vadd.f32 %v783, %v852
  %v854 = vpop.f32.mrb[0].mxu0
  %855 = vdwg.mxu0
  %vm856 = vcmask 818176
  %857 = vst.msk [vmem:[%s3] sm:$0xff] %vm856, %v853
  %v858 = vmax.f32 %v853, 0.0
  %v859 = vsel %vm856, %v858, 0.0
  %v860 = vrot.slane %v859, 4
  %v861 = vadd.f32 %v859, %v860
  %v862 = vrot.slane %v861, 2
  %v863 = vadd.f32 %v861, %v862
  %v864 = vrot.slane %v863, 1
  %v865 = vadd.f32 %v863, %v864
  %v866 = vmul.f32 %v858, %v858
  %v867 = vsel %vm856, %v866, 0.0
  %v868 = vrot.slane %v867, 4
  %v869 = vadd.f32 %v867, %v868
  %v870 = vrot.slane %v869, 2
  %v871 = vadd.f32 %v869, %v870
  %v872 = vrot.slane %v871, 1
  %v873 = vadd.f32 %v871, %v872
  %874 = vst.msk [vmem:[%s4] sm:$0xff] %vm856, %v865
  %875 = vst.msk [vmem:[%s5] sm:$0xff] %vm856, %v873
  // Predicated region
  $region14: #{model_linear_forward.2} parent=0 // pred_check
    _
  $region15: #{model_linear_forward.2} parent=0 // pred_check_branch
    %877 = sbr.rel (0) target = $region17
  $region16: #{model_linear_forward.2} parent=0 // pred_region
    _
  $region17: #{model_linear_forward.2} parent=0 // pred_fallthru
    _
  // Predicated region
  $region18: #{model_linear_forward.2} parent=0 // pred_check
    _
  $region19: #{model_linear_forward.2} parent=0 // pred_check_branch
    %879 = sbr.rel (0) target = $region21
  $region20: #{model_linear_forward.2} parent=0 // pred_region
    _
  $region21: #{model_linear_forward.2} parent=0 // pred_fallthru
    _
  // Predicated region
  $region22: #{model_linear_forward.2} parent=0 // pred_check
    _
  $region23: #{model_linear_forward.2} parent=0 // pred_check_branch
    %881 = sbr.rel (0) target = $region25
  $region24: #{model_linear_forward.2} parent=0 // pred_region
    _
  $region25: #{model_linear_forward.2} parent=0 // pred_fallthru
    _
  // Predicated region
  $region26: #{model_linear_forward.2} parent=0 // pred_check
    _
  $region27: #{model_linear_forward.2} parent=0 // pred_check_branch
    %883 = sbr.rel (0) target = $region29
  $region28: #{model_linear_forward.2} parent=0 // pred_region
    _
  $region29: #{model_linear_forward.2} parent=0 // pred_fallthru
    _
  // Predicated region
  $region30: #{model_linear_forward.2} parent=0 // pred_check
    _
  $region31: #{model_linear_forward.2} parent=0 // pred_check_branch
    %885 = sbr.rel (0) target = $region33
  $region32: #{model_linear_forward.2} parent=0 // pred_region
    _
  $region33: #{model_linear_forward.2} parent=0 // pred_fallthru
    _
  // Predicated region
  $region34: #{model_linear_forward.2} parent=0 // pred_check
    _
  $region35: #{model_linear_forward.2} parent=0 // pred_check_branch
    %887 = sbr.rel (0) target = $region37
  $region36: #{model_linear_forward.2} parent=0 // pred_region
    _
  $region37: #{model_linear_forward.2} parent=0 // pred_fallthru
    _

</llo_original>
